<compile_context>
chip_gen: v6e
topology: v6e:2x2x1
jax: 0.10.0
libtpu: 0.0.40
codegen_flags: <defaults>
</compile_context>

<pallas_src>
import numpy as np
import jax
import jax.numpy as jnp
from jax.experimental import pallas as pl
from jax.experimental.pallas import tpu as pltpu


def _round_up(x, m):
    return (x + m - 1) // m * m


def _lowpass_frames_kernel(r_ref, frames_ref, c_ref, out_ref):
    # r_ref      : (B,) int32 scalar-prefetch (consumed by index_maps only)
    # frames_ref : (1, TN, nfft)   raw frames tile (one batch row), bf16
    # c_ref      : (1, nfft, nfft) combined window*rDFT*mask*irDFT*window, bf16
    # out_ref    : (1, TN, nfft)   masked + reconstructed (synthesis-windowed) frames, f32
    del r_ref
    out_ref[0] = jnp.dot(frames_ref[0], c_ref[0],
                         preferred_element_type=jnp.float32
                         ).astype(out_ref.dtype)                          # single MXU pass


class LowPassPallas:
    def __init__(self, nfft=1024, hop=256,
                 ratio=(1 / 6, 1 / 3, 1 / 2, 2 / 3, 3 / 4, 4 / 5, 5 / 6, 1 / 1),
                 frame_tile=1024):
        assert nfft % hop == 0, "overlap-add glue assumes hop divides nfft"
        self.nfft = nfft
        self.hop = hop
        self.frame_tile = frame_tile

        n = np.arange(nfft, dtype=np.float64)
        window = 0.5 * (1.0 - np.cos(2.0 * np.pi * n / nfft))   # periodic hann
        self._window_np = window
        self.window = jnp.asarray(window, jnp.float32)

        F = nfft // 2 + 1
        self.F = F
        filt = np.ones((len(ratio), F), np.float64)
        for i, r in enumerate(ratio):
            filt[i, int(F * r):] = 0.0
        self.filters = jnp.asarray(filt, jnp.float32)           # (n_ratio, F)

        # Combined per-ratio matrices C_r (f64 construction, bf16 MXU operand):
        #   out_frame = frame @ C_r,   C_r = A_cos diag(m) S_cos^T + A_sin diag(m) S_sin^T
        # with the analysis window folded into A_* rows and the synthesis
        # window + irfft scaling folded into S_* rows.
        k = np.arange(F, dtype=np.float64)
        ang = 2.0 * np.pi * np.outer(n, k) / nfft               # (nfft, F)
        ck = np.full((F,), 2.0, np.float64)
        ck[0] = 1.0
        if nfft % 2 == 0:
            ck[F - 1] = 1.0
        a_cos = window[:, None] * np.cos(ang)                   # analysis
        a_sin = window[:, None] * np.sin(ang)
        s_cos = (ck[None, :] / nfft) * np.cos(ang) * window[:, None]   # synthesis
        s_sin = (ck[None, :] / nfft) * np.sin(ang) * window[:, None]
        combined = np.empty((len(ratio), nfft, nfft), np.float32)
        for i in range(len(ratio)):
            m = filt[i]
            combined[i] = ((a_cos * m) @ s_cos.T
                           + (a_sin * m) @ s_sin.T).astype(np.float32)
        self.combined = jnp.asarray(combined, jnp.bfloat16)     # (n_ratio, nfft, nfft)
        # TODO(synk): for small cutoff ratios C_r is low rank; a per-ratio
        # factored form (scalar-prefetched chunk count + fori_loop) would cut
        # more MXU flops on v5e.

        self._forward = jax.jit(self._forward_impl)

    def __call__(self, x, r):
        if x.ndim == 1:
            x = x[None, :]
        return self._forward(x.astype(jnp.float32), jnp.asarray(r, jnp.int32))

    def _forward_impl(self, x, r):
        nfft, hop = self.nfft, self.hop
        B, T = x.shape

        # F.pad(x, (0, nfft)) then torch.stft(center=True) reflect padding.
        xp = jnp.pad(x, ((0, 0), (0, nfft)))
        xc = jnp.pad(xp, ((0, 0), (nfft // 2, nfft // 2)), mode='reflect')
        n_frames = 1 + (T + nfft) // hop
        idx = np.arange(n_frames)[:, None] * hop + np.arange(nfft)[None, :]
        frames = xc[:, idx].astype(jnp.bfloat16)                # (B, n_frames, nfft)
        # TODO(synk): frame extraction could be fused into the kernel via
        # memory_space=pl.ANY + per-tile strided async copies; kept as an
        # in-jit bf16 gather so XLA schedules it next to the pallas_call.

        # Frame-tile: as large as possible (amortize per-step overhead),
        # multiple of 16 (bf16 sublane packing), but keep >= 2 total grid
        # steps so both v7x TensorCores are used.
        TN = min(_round_up(self.frame_tile, 16), _round_up(n_frames, 16))
        NFp = _round_up(n_frames, TN)
        if B * (NFp // TN) < 2 and TN > 16:
            TN = _round_up((n_frames + 1) // 2, 16)
            NFp = _round_up(n_frames, TN)
        frames = jnp.pad(frames, ((0, 0), (0, NFp - n_frames), (0, 0)))

        out_frames = pl.pallas_call(
            _lowpass_frames_kernel,
            out_shape=jax.ShapeDtypeStruct((B, NFp, nfft), jnp.float32),
            grid_spec=pltpu.PrefetchScalarGridSpec(
                num_scalar_prefetch=1,
                grid=(B, NFp // TN),                            # frame tiles innermost
                in_specs=[
                    pl.BlockSpec((1, TN, nfft), lambda b, t, rr: (b, t, 0)),
                    pl.BlockSpec((1, nfft, nfft), lambda b, t, rr: (rr[b], 0, 0)),
                ],
                out_specs=pl.BlockSpec((1, TN, nfft), lambda b, t, rr: (b, t, 0)),
            ),
            compiler_params=pltpu.CompilerParams(
                dimension_semantics=("parallel", "parallel"),
                vmem_limit_bytes=40 * 1024 * 1024),
        )(r, frames, self.combined)

        out_frames = out_frames[:, :n_frames, :]
        # TODO(synk): emitting out_frames as bf16 would halve output DMA; kept
        # f32 so the overlap-add stays inside the accuracy budget.
        # TODO(synk): the overlap-add could be pre-summed per tile inside the
        # kernel (leaving only tile seams), cutting output HBM traffic ~4x.

        # torch.istft overlap-add: one fused sum of R shifted hop-segments.
        R = nfft // hop
        seg_len = n_frames * hop
        y = sum(
            jnp.pad(out_frames[:, :, j * hop:(j + 1) * hop].reshape(B, seg_len),
                    ((0, 0), (j * hop, (R - 1 - j) * hop)))
            for j in range(R))                                  # (B, ola_len)

        # window^2 envelope: input-independent once n_frames is known ->
        # precompute its reciprocal with numpy at trace time.
        ola_len = hop * (n_frames - 1) + nfft
        wsq = self._window_np ** 2
        env = np.zeros((ola_len,), np.float64)
        for t0 in range(n_frames):
            env[t0 * hop:t0 * hop + nfft] += wsq
        start = nfft // 2
        out_len = hop * (n_frames - 1)                          # istft(center=True)
        inv_env = jnp.asarray(1.0 / env[start:start + out_len], jnp.float32)

        y = y[:, start:start + out_len] * inv_env[None, :]
        return y[:, :T]


def _reference(lp, x, r):
    """Pure-JAX (f32 FFT based) reference of the same forward pass."""
    nfft, hop = lp.nfft, lp.hop
    if x.ndim == 1:
        x = x[None, :]
    x = x.astype(jnp.float32)
    B, T = x.shape
    xp = jnp.pad(x, ((0, 0), (0, nfft)))
    xc = jnp.pad(xp, ((0, 0), (nfft // 2, nfft // 2)), mode='reflect')
    n_frames = 1 + (T + nfft) // hop
    idx = np.arange(n_frames)[:, None] * hop + np.arange(nfft)[None, :]
    frames = xc[:, idx] * lp.window[None, None, :]
    spec = jnp.fft.rfft(frames, axis=-1)
    spec = spec * lp.filters[r][:, None, :]
    fr = jnp.fft.irfft(spec, n=nfft, axis=-1) * lp.window[None, None, :]
    ola_len = hop * (n_frames - 1) + nfft
    y = jnp.zeros((B, ola_len), jnp.float32)
    env = jnp.zeros((ola_len,), jnp.float32)
    wsq = lp.window ** 2
    for t in range(n_frames):
        y = y.at[:, t * hop:t * hop + nfft].add(fr[:, t])
        env = env.at[t * hop:t * hop + nfft].add(wsq)
    start = nfft // 2
    out_len = hop * (n_frames - 1)
    return (y[:, start:start + out_len] / env[start:start + out_len])[:, :T]


if __name__ == "__main__":
    nfft, hop = 256, 64            # small but structurally identical to defaults
    B, T = 2, 2048
    lp = LowPassPallas(nfft=nfft, hop=hop)

    key = jax.random.PRNGKey(0)
    x = jax.random.normal(key, (B, T), jnp.float32)
    r = jnp.array([2, 7], dtype=jnp.int32)   # per-batch cutoff-ratio indices

    out = jax.block_until_ready(lp(x, r))
    assert out.shape == (B, T), out.shape

    ref = _reference(lp, x, r)
    err = float(jnp.max(jnp.abs(out - ref)))
    assert err < 2e-2, f"max abs error vs FFT reference: {err}"

    print("KERNEL_OK")
</pallas_src>

<mosaic_0001>
module attributes {stable_mosaic.version = 11 : i64} {
  func.func @_lowpass_frames_kernel(%arg0: i32, %arg1: i32, %arg2: memref<2xi32, #tpu.memory_space<smem>>, %arg3: memref<1x48x256xbf16, #tpu.memory_space<vmem>>, %arg4: memref<1x256x256xbf16, #tpu.memory_space<vmem>>, %arg5: memref<1x48x256xf32, #tpu.memory_space<vmem>>) attributes {dimension_semantics = [#tpu.dimension_semantics<parallel>, #tpu.dimension_semantics<parallel>], iteration_bounds = array<i64: 2, 1>, scalar_prefetch = 1 : i64, scratch_operands = 0 : i64, tpu.core_type = #tpu.core_type<tc>, window_params = [{transform_indices = @transform_0, window_bounds = array<i64: 1, 48, 256>}, {transform_indices = @transform_1, window_bounds = array<i64: 1, 256, 256>}, {transform_indices = @transform_2, window_bounds = array<i64: 1, 48, 256>}]} {
    %c0 = arith.constant 0 : index
    %c0_0 = arith.constant 0 : index
    %c0_1 = arith.constant 0 : index
    %0 = vector.load %arg3[%c0, %c0_0, %c0_1] : memref<1x48x256xbf16, #tpu.memory_space<vmem>>, vector<1x48x256xbf16>
    %1 = vector.shape_cast %0 : vector<1x48x256xbf16> to vector<48x256xbf16>
    %c0_2 = arith.constant 0 : index
    %c0_3 = arith.constant 0 : index
    %c0_4 = arith.constant 0 : index
    %2 = vector.load %arg4[%c0_2, %c0_3, %c0_4] : memref<1x256x256xbf16, #tpu.memory_space<vmem>>, vector<1x256x256xbf16>
    %3 = vector.shape_cast %2 : vector<1x256x256xbf16> to vector<256x256xbf16>
    %cst = arith.constant dense<0.000000e+00> : vector<48x256xf32>
    %4 = tpu.matmul %1, %3, %cst {dimension_numbers = #tpu.dot_dimension_numbers<[1], [0], [0], [1], [0, 0, 1, 1], [], []>} : vector<48x256xbf16>, vector<256x256xbf16>, vector<48x256xf32> -> vector<48x256xf32>
    %c0_5 = arith.constant 0 : index
    %c0_6 = arith.constant 0 : index
    %c0_7 = arith.constant 0 : index
    %5 = vector.load %arg5[%c0_5, %c0_6, %c0_7] : memref<1x48x256xf32, #tpu.memory_space<vmem>>, vector<1x48x256xf32>
    %6 = vector.shape_cast %5 : vector<1x48x256xf32> to vector<48x256xf32>
    %7 = vector.shape_cast %4 : vector<48x256xf32> to vector<1x48x256xf32>
    tpu.vector_store %arg5[%c0_5, %c0_6, %c0_7], %7 {strides = array<i32>} : memref<1x48x256xf32, #tpu.memory_space<vmem>>, vector<1x48x256xf32>,
    return
  }
  func.func @transform_0(%arg0: i32, %arg1: i32, %arg2: memref<2xi32, #tpu.memory_space<smem>>) -> (i32, i32, i32) {
    %c0_i32 = arith.constant 0 : i32
    %c0_i32_0 = arith.constant 0 : i32
    return %arg0, %arg1, %c0_i32 : i32, i32, i32
  }
  func.func @transform_1(%arg0: i32, %arg1: i32, %arg2: memref<2xi32, #tpu.memory_space<smem>>) -> (i32, i32, i32) {
    %0 = arith.index_cast %arg0 : i32 to index
    %1 = memref.load %arg2[%0] : memref<2xi32, #tpu.memory_space<smem>>
    %c0_i32 = arith.constant 0 : i32
    %c0_i32_0 = arith.constant 0 : i32
    %c0_i32_1 = arith.constant 0 : i32
    return %1, %c0_i32, %c0_i32_0 : i32, i32, i32
  }
  func.func @transform_2(%arg0: i32, %arg1: i32, %arg2: memref<2xi32, #tpu.memory_space<smem>>) -> (i32, i32, i32) {
    %c0_i32 = arith.constant 0 : i32
    %c0_i32_0 = arith.constant 0 : i32
    return %arg0, %arg1, %c0_i32 : i32, i32, i32
  }
}

</mosaic_0001>

<llo_original>
// kernel: _forward_impl.1
$region0: #{_forward_impl.1}
  #allocation0 [shape = 'u32[]', space=smem, size = 0x4, offset = 0x4, fixed_abs, tag = 'smem constant byte address 0x4 - core index']
  #allocation1 [shape = 'u32[144,128]{1,0:T(1,128)}', space=vmem, size = 0x12000, scoped, tag = 'internal scratch']
  #allocation2 [shape = 's32[1]{0}', space=sflag, size = 0x4, scoped, tag = 'scoped memory for _forward_impl.1']
  #allocation3 [shape = 'u8[512]{0}', space=smem, size = 0x200, scoped, tag = 'prefetched SMEM operand 0']
  %s0 = inlined_call_operand.vmem [shape: s32[2], index: 0, kind: input, shape index: {}]
  %s1 = inlined_call_operand.vmem [shape: bf16[2,48,256], index: 1, kind: input, shape index: {}]
  %s2 = inlined_call_operand.vmem [shape: bf16[8,256,256], index: 2, kind: input, shape index: {}]
  %s3 = inlined_call_operand.vmem [shape: f32[2,48,256], index: 3, kind: output, shape index: {}]
  %s4 = sld [smem:[#allocation0]]
  $region41: #{_forward_impl.1} parent=0
    _
  %s6 = ssub.s32 1, %s4
  %s7 = scalar_select 0, %s6, %s4
  %s8 = sshll.u32 %s0, 4
  %s9 = int_to_ptr.vmem [resolvable:$true] %s8
  %11 = dma.vmem_to_smem %s9, 16, [#allocation3], [#allocation2]
  %12 = dma.done [#allocation2], 16
  %13 = sfence
  loop: start=0, step=1, limit=4
  $region2: #{_forward_impl.1} parent=0 // loop_pre_header
    _
  $region3: #{_forward_impl.1} parent=0 // loop_header
    %s15 = sphi 0, %s19
    %p16 = scmp.ge.s32.totalorder %s15, 4
    %s22 = sphi 0, %s34
    %s23 = sphi 0, %s30
    %s24 = sphi 0, %s22
    %s25 = sphi 0, %s23
    %s26 = sphi 0, %s24
    %s27 = sphi 0, %s25
    %s39 = sphi 0, %s41
    %s42 = sphi 0, %s39
    %s43 = sphi 0, %s42
    %s59 = sphi 0, %s43
    %s67 = sphi 0, %s69
    %s70 = sphi 0, %s67
    %s71 = sphi 0, %s70
    %s87 = sphi 0, %s71
    %s95 = sphi 0, %s97
    %s98 = sphi 0, %s95
    %s99 = sphi 0, %s98
    %s115 = sphi 0, %s99
  $region4: #{_forward_impl.1} parent=0 // loop_header_branch
    %18 = sbr.rel (%p16) target = $region8
  $region5: #{_forward_impl.1} parent=0 // loop_body
    %s20 = ssub.s32 %s15, 1
    %s21 = ssub.s32 %s15, 2
    %s28 = sadd.s32 1, %s23
    %p29 = scmp.ge.s32.totalorder %s28, 1
    %s30 = scalar_select %p29, 0, %s28
    %s31 = sadd.s32 1, %s22
    %s32 = scalar_select %p29, %s31, %s22
    %p33 = scmp.ge.s32.totalorder %s32, 2
    %s34 = scalar_select %p33, 0, %s32
    %s35 = ssub.s32 %s22, %s34
    %s36 = ssub.s32 %s23, %s30
    %s37 = sor.u32 %s35, %s36
    %p38 = scmp.eq.s32.totalorder %s37, 0
    %s40 = sadd.s32 %s39, 1
    %s41 = scalar_select %p38, %s39, %s40
    %p44 = pneg %p38
    %p45 = scmp.eq.s32.totalorder %s15, 1
    %p46 = por %p44, %p45
    %p47 = scmp.ne.s32.totalorder %s39, %s42
    %p48 = scmp.eq.s32.totalorder %s15, 0
    %p49 = por %p47, %p48
    %p50 = scmp.ne.s32.totalorder %s39, %s42
    %p51 = scmp.eq.s32.totalorder %s20, 1
    %p52 = por %p50, %p51
    %p53 = scmp.ne.s32.totalorder %s42, %s43
    %p54 = scmp.eq.s32.totalorder %s20, 0
    %p55 = por %p53, %p54
    %p56 = scmp.ne.s32.totalorder %s42, %s43
    %p57 = scmp.eq.s32.totalorder %s21, 1
    %p58 = por %p56, %p57
    %p60 = scmp.ne.s32.totalorder %s43, %s59
    %p61 = scmp.eq.s32.totalorder %s21, 0
    %p62 = por %p60, %p61
    %s63 = sld [smem:[#allocation3 + %s22]]
    %s64 = sld [smem:[#allocation3 + %s34]]
    %s65 = ssub.s32 %s63, %s64
    %p66 = scmp.eq.s32.totalorder %s65, 0
    %s68 = sadd.s32 %s67, 1
    %s69 = scalar_select %p66, %s67, %s68
    %p72 = pneg %p66
    %p73 = scmp.eq.s32.totalorder %s15, 1
    %p74 = por %p72, %p73
    %p75 = scmp.ne.s32.totalorder %s67, %s70
    %p76 = scmp.eq.s32.totalorder %s15, 0
    %p77 = por %p75, %p76
    %p78 = scmp.ne.s32.totalorder %s67, %s70
    %p79 = scmp.eq.s32.totalorder %s20, 1
    %p80 = por %p78, %p79
    %p81 = scmp.ne.s32.totalorder %s70, %s71
    %p82 = scmp.eq.s32.totalorder %s20, 0
    %p83 = por %p81, %p82
    %p84 = scmp.ne.s32.totalorder %s70, %s71
    %p85 = scmp.eq.s32.totalorder %s21, 1
    %p86 = por %p84, %p85
    %p88 = scmp.ne.s32.totalorder %s71, %s87
    %p89 = scmp.eq.s32.totalorder %s21, 0
    %p90 = por %p88, %p89
    %s91 = ssub.s32 %s22, %s34
    %s92 = ssub.s32 %s23, %s30
    %s93 = sor.u32 %s91, %s92
    %p94 = scmp.eq.s32.totalorder %s93, 0
    %s96 = sadd.s32 %s95, 1
    %s97 = scalar_select %p94, %s95, %s96
    %p100 = pneg %p94
    %p101 = scmp.eq.s32.totalorder %s15, 1
    %p102 = por %p100, %p101
    %p103 = scmp.ne.s32.totalorder %s95, %s98
    %p104 = scmp.eq.s32.totalorder %s15, 0
    %p105 = por %p103, %p104
    %p106 = scmp.ne.s32.totalorder %s95, %s98
    %p107 = scmp.eq.s32.totalorder %s20, 1
    %p108 = por %p106, %p107
    %p109 = scmp.ne.s32.totalorder %s98, %s99
    %p110 = scmp.eq.s32.totalorder %s20, 0
    %p111 = por %p109, %p110
    %p112 = scmp.ne.s32.totalorder %s98, %s99
    %p113 = scmp.eq.s32.totalorder %s21, 1
    %p114 = por %p112, %p113
    %p116 = scmp.ne.s32.totalorder %s99, %s115
    %p117 = scmp.eq.s32.totalorder %s21, 0
    %p118 = por %p116, %p117
    %p119 = scmp.le.s32.totalorder 1, %s15
    %p120 = scmp.lt.s32.totalorder %s15, 3
    %p121 = pnand %p119, %p120
    %p122 = pneg %p121
    // Predicated region
    $region9: #{_forward_impl.1} parent=5 // pred_check
      _
    $region10: #{_forward_impl.1} parent=5 // pred_check_branch
      %124 = sbr.rel (%p121) target = $region12
    $region11: #{_forward_impl.1} parent=5 // pred_region
      %s125 = ssub.s32 %s15, 1
    $region12: #{_forward_impl.1} parent=5 // pred_fallthru
      _
    %p126 = scmp.lt.s32.totalorder %s15, 2
    // Predicated region
    $region13: #{_forward_impl.1} parent=5 // pred_check
      %p127 = pneg %p126
    $region14: #{_forward_impl.1} parent=5 // pred_check_branch
      %129 = sbr.rel (%p127) target = $region16
    $region15: #{_forward_impl.1} parent=5 // pred_region
      // Predicated region
      $region17: #{_forward_impl.1} parent=15 // pred_check
        %p130 = pneg %p49
      $region18: #{_forward_impl.1} parent=15 // pred_check_branch
        %132 = sbr.rel (%p130) target = $region20
      $region19: #{_forward_impl.1} parent=15 // pred_region
        %s133 = smul.u32 6, %s23
        %p134 = scmp.lt.s32.totalorder %s22, 1
        %s135 = scalar_select %p134, %s22, 1
        %p136 = scmp.lt.s32.totalorder %s133, 5
        %s137 = scalar_select %p136, %s133, 5
        %s138 = smul.addr %s137, 2
        %s139 = smul.addr %s135, 12
        %s140 = sadd.s32 %s138, %s139
        %s141 = smul.addr %s140, 4
        %s142 = scalar_lea.vmem %s1, %s141
        %s143 = smul.u32 6, %s23
      $region20: #{_forward_impl.1} parent=15 // pred_fallthru
        _
      // Predicated region
      $region21: #{_forward_impl.1} parent=15 // pred_check
        %p144 = pneg %p77
      $region22: #{_forward_impl.1} parent=15 // pred_check_branch
        %146 = sbr.rel (%p144) target = $region24
      $region23: #{_forward_impl.1} parent=15 // pred_region
        %s147 = sld [smem:[#allocation3 + %s22]]
        %p148 = scmp.lt.s32.totalorder %s147, 7
        %s149 = scalar_select %p148, %s147, 7
        %s150 = smul.addr %s149, 64
        %s151 = smul.addr %s150, 4
        %s152 = scalar_lea.vmem %s2, %s151
        %s153 = sld [smem:[#allocation3 + %s22]]
      $region24: #{_forward_impl.1} parent=15 // pred_fallthru
        _
    $region16: #{_forward_impl.1} parent=5 // pred_fallthru
      _
    %p154 = scmp.le.s32.totalorder 1, %s15
    %p155 = scmp.lt.s32.totalorder %s15, 3
    %p156 = pnand %p154, %p155
    %p157 = pneg %p156
    // Predicated region
    $region25: #{_forward_impl.1} parent=5 // pred_check
      _
    $region26: #{_forward_impl.1} parent=5 // pred_check_branch
      %159 = sbr.rel (%p156) target = $region28
    $region27: #{_forward_impl.1} parent=5 // pred_region
      %s160 = ssub.s32 %s15, 1
      %s161 = smul.u32 6, %s25
      %p162 = scmp.lt.s32.totalorder %s24, 1
      %s163 = scalar_select %p162, %s24, 1
      %p164 = scmp.lt.s32.totalorder %s161, 5
      %s165 = scalar_select %p164, %s161, 5
      %s166 = smul.addr %s165, 2
      %s167 = smul.addr %s163, 12
      %s168 = sadd.s32 %s166, %s167
      %s169 = smul.addr %s168, 4
      %s170 = scalar_lea.vmem %s1, %s169
      %p171 = pneg %p55
      %p172 = pneg %p52
      %s173 = sld [smem:[#allocation3 + %s24]]
      %p174 = scmp.lt.s32.totalorder %s173, 7
      %s175 = scalar_select %p174, %s173, 7
      %s176 = smul.addr %s175, 64
      %s177 = smul.addr %s176, 4
      %s178 = scalar_lea.vmem %s2, %s177
      %p179 = pneg %p83
      %p180 = pneg %p80
      %p181 = pneg %p111
      %p182 = pneg %p108
      %s183 = smul.u32 6, %s25
      %p184 = scmp.lt.s32.totalorder %s24, 1
      %s185 = scalar_select %p184, %s24, 1
      %p186 = scmp.lt.s32.totalorder %s183, 5
      %s187 = scalar_select %p186, %s183, 5
      %s188 = smul.addr %s187, 2
      %s189 = smul.addr %s185, 12
      %s190 = sadd.s32 %s188, %s189
      %s191 = smul.addr %s190, 8
      %s192 = scalar_lea.vmem %s3, %s191
      %s193 = smul.u32 6, %s25
      %p194 = scmp.lt.s32.totalorder %s24, 1
      %s195 = scalar_select %p194, %s24, 1
      %p196 = scmp.lt.s32.totalorder %s193, 5
      %s197 = scalar_select %p196, %s193, 5
      %s198 = smul.addr %s197, 2
      %s199 = smul.addr %s195, 12
      %s200 = sadd.s32 %s198, %s199
      %s201 = smul.addr %s200, 4
      %s202 = scalar_lea.vmem %s1, %s201
      %s203 = smul.u32 6, %s25
      %s204 = sld [smem:[#allocation3 + %s24]]
      %p205 = scmp.lt.s32.totalorder %s204, 7
      %s206 = scalar_select %p205, %s204, 7
      %s207 = smul.addr %s206, 64
      %s208 = smul.addr %s207, 4
      %s209 = scalar_lea.vmem %s2, %s208
      %s210 = sld [smem:[#allocation3 + %s24]]
      %s211 = smul.u32 6, %s25
      %p212 = scmp.lt.s32.totalorder %s24, 1
      %s213 = scalar_select %p212, %s24, 1
      %p214 = scmp.lt.s32.totalorder %s211, 5
      %s215 = scalar_select %p214, %s211, 5
      %s216 = smul.addr %s215, 2
      %s217 = smul.addr %s213, 12
      %s218 = sadd.s32 %s216, %s217
      %s219 = smul.addr %s218, 8
      %s220 = scalar_lea.vmem %s3, %s219
      %s221 = smul.u32 6, %s25
      %v222 = vld [vmem:[%s202] sm:$0xff]
      %v223 = vld [vmem:[%s202 + $0x8] sm:$0xff]
      %v224 = vld [vmem:[%s202 + $0x10] sm:$0xff]
      %v225 = vld [vmem:[%s202 + $0x18] sm:$0xff]
      %v226 = vld [vmem:[%s202 + $0x20] sm:$0xff]
      %v227 = vld [vmem:[%s202 + $0x28] sm:$0xff]
      %v228 = vld [vmem:[%s209] sm:$0xff]
      %v229 = vld [vmem:[%s209 + $0x8] sm:$0xff]
      %v230 = vld [vmem:[%s209 + $0x10] sm:$0xff]
      %v231 = vld [vmem:[%s209 + $0x18] sm:$0xff]
      %v232 = vld [vmem:[%s209 + $0x20] sm:$0xff]
      %v233 = vld [vmem:[%s209 + $0x28] sm:$0xff]
      %v234 = vld [vmem:[%s209 + $0x30] sm:$0xff]
      %v235 = vld [vmem:[%s209 + $0x38] sm:$0xff]
      %v236 = vld [vmem:[%s209 + $0x40] sm:$0xff]
      %v237 = vld [vmem:[%s209 + $0x48] sm:$0xff]
      %v238 = vld [vmem:[%s209 + $0x50] sm:$0xff]
      %v239 = vld [vmem:[%s209 + $0x58] sm:$0xff]
      %v240 = vld [vmem:[%s209 + $0x60] sm:$0xff]
      %v241 = vld [vmem:[%s209 + $0x68] sm:$0xff]
      %v242 = vld [vmem:[%s209 + $0x70] sm:$0xff]
      %v243 = vld [vmem:[%s209 + $0x78] sm:$0xff]
      %v244 = vld [vmem:[%s209 + $0x80] sm:$0xff]
      %v245 = vld [vmem:[%s209 + $0x88] sm:$0xff]
      %v246 = vld [vmem:[%s209 + $0x90] sm:$0xff]
      %v247 = vld [vmem:[%s209 + $0x98] sm:$0xff]
      %v248 = vld [vmem:[%s209 + $0xa0] sm:$0xff]
      %v249 = vld [vmem:[%s209 + $0xa8] sm:$0xff]
      %v250 = vld [vmem:[%s209 + $0xb0] sm:$0xff]
      %v251 = vld [vmem:[%s209 + $0xb8] sm:$0xff]
      %v252 = vld [vmem:[%s209 + $0xc0] sm:$0xff]
      %v253 = vld [vmem:[%s209 + $0xc8] sm:$0xff]
      %v254 = vld [vmem:[%s209 + $0xd0] sm:$0xff]
      %v255 = vld [vmem:[%s209 + $0xd8] sm:$0xff]
      %v256 = vld [vmem:[%s209 + $0xe0] sm:$0xff]
      %v257 = vld [vmem:[%s209 + $0xe8] sm:$0xff]
      %v258 = vld [vmem:[%s209 + $0xf0] sm:$0xff]
      %v259 = vld [vmem:[%s209 + $0xf8] sm:$0xff]
      %v266 = vunpack.c.l.b16 %v222
      %v267 = vunpack.c.h.b16 %v222
      %v268 = vunpack.c.l.b16 %v223
      %v269 = vunpack.c.h.b16 %v223
      %v270 = vunpack.c.l.b16 %v224
      %v271 = vunpack.c.h.b16 %v224
      %v272 = vunpack.c.l.b16 %v225
      %v273 = vunpack.c.h.b16 %v225
      %v274 = vunpack.c.l.b16 %v226
      %v275 = vunpack.c.h.b16 %v226
      %v276 = vunpack.c.l.b16 %v227
      %v277 = vunpack.c.h.b16 %v227
      %v278 = vpack.c.b16 %v268, %v266
      %v279 = vpack.c.b16 %v269, %v267
      %v280 = vpack.c.b16 %v272, %v270
      %v281 = vpack.c.b16 %v273, %v271
      %v282 = vpack.c.b16 %v276, %v274
      %v283 = vpack.c.b16 %v277, %v275
      %v322 = vunpack.c.l.b16 %v228
      %v323 = vunpack.c.h.b16 %v228
      %v324 = vunpack.c.l.b16 %v229
      %v325 = vunpack.c.h.b16 %v229
      %v326 = vunpack.c.l.b16 %v230
      %v327 = vunpack.c.h.b16 %v230
      %v328 = vunpack.c.l.b16 %v231
      %v329 = vunpack.c.h.b16 %v231
      %v330 = vunpack.c.l.b16 %v232
      %v331 = vunpack.c.h.b16 %v232
      %v332 = vunpack.c.l.b16 %v233
      %v333 = vunpack.c.h.b16 %v233
      %v334 = vunpack.c.l.b16 %v234
      %v335 = vunpack.c.h.b16 %v234
      %v336 = vunpack.c.l.b16 %v235
      %v337 = vunpack.c.h.b16 %v235
      %v338 = vunpack.c.l.b16 %v236
      %v339 = vunpack.c.h.b16 %v236
      %v340 = vunpack.c.l.b16 %v237
      %v341 = vunpack.c.h.b16 %v237
      %v342 = vunpack.c.l.b16 %v238
      %v343 = vunpack.c.h.b16 %v238
      %v344 = vunpack.c.l.b16 %v239
      %v345 = vunpack.c.h.b16 %v239
      %v346 = vunpack.c.l.b16 %v240
      %v347 = vunpack.c.h.b16 %v240
      %v348 = vunpack.c.l.b16 %v241
      %v349 = vunpack.c.h.b16 %v241
      %v350 = vunpack.c.l.b16 %v242
      %v351 = vunpack.c.h.b16 %v242
      %v352 = vunpack.c.l.b16 %v243
      %v353 = vunpack.c.h.b16 %v243
      %v354 = vunpack.c.l.b16 %v244
      %v355 = vunpack.c.h.b16 %v244
      %v356 = vunpack.c.l.b16 %v245
      %v357 = vunpack.c.h.b16 %v245
      %v358 = vunpack.c.l.b16 %v246
      %v359 = vunpack.c.h.b16 %v246
      %v360 = vunpack.c.l.b16 %v247
      %v361 = vunpack.c.h.b16 %v247
      %v362 = vunpack.c.l.b16 %v248
      %v363 = vunpack.c.h.b16 %v248
      %v364 = vunpack.c.l.b16 %v249
      %v365 = vunpack.c.h.b16 %v249
      %v366 = vunpack.c.l.b16 %v250
      %v367 = vunpack.c.h.b16 %v250
      %v368 = vunpack.c.l.b16 %v251
      %v369 = vunpack.c.h.b16 %v251
      %v370 = vunpack.c.l.b16 %v252
      %v371 = vunpack.c.h.b16 %v252
      %v372 = vunpack.c.l.b16 %v253
      %v373 = vunpack.c.h.b16 %v253
      %v374 = vunpack.c.l.b16 %v254
      %v375 = vunpack.c.h.b16 %v254
      %v376 = vunpack.c.l.b16 %v255
      %v377 = vunpack.c.h.b16 %v255
      %v378 = vunpack.c.l.b16 %v256
      %v379 = vunpack.c.h.b16 %v256
      %v380 = vunpack.c.l.b16 %v257
      %v381 = vunpack.c.h.b16 %v257
      %v382 = vunpack.c.l.b16 %v258
      %v383 = vunpack.c.h.b16 %v258
      %v384 = vunpack.c.l.b16 %v259
      %v385 = vunpack.c.h.b16 %v259
      %v386 = vpack.c.b16 %v324, %v322
      %v387 = vpack.c.b16 %v325, %v323
      %v388 = vpack.c.b16 %v328, %v326
      %v389 = vpack.c.b16 %v329, %v327
      %v390 = vpack.c.b16 %v332, %v330
      %v391 = vpack.c.b16 %v333, %v331
      %v392 = vpack.c.b16 %v336, %v334
      %v393 = vpack.c.b16 %v337, %v335
      %v394 = vpack.c.b16 %v340, %v338
      %v395 = vpack.c.b16 %v341, %v339
      %v396 = vpack.c.b16 %v344, %v342
      %v397 = vpack.c.b16 %v345, %v343
      %v398 = vpack.c.b16 %v348, %v346
      %v399 = vpack.c.b16 %v349, %v347
      %v400 = vpack.c.b16 %v352, %v350
      %v401 = vpack.c.b16 %v353, %v351
      %v402 = vpack.c.b16 %v356, %v354
      %v403 = vpack.c.b16 %v357, %v355
      %v404 = vpack.c.b16 %v360, %v358
      %v405 = vpack.c.b16 %v361, %v359
      %v406 = vpack.c.b16 %v364, %v362
      %v407 = vpack.c.b16 %v365, %v363
      %v408 = vpack.c.b16 %v368, %v366
      %v409 = vpack.c.b16 %v369, %v367
      %v410 = vpack.c.b16 %v372, %v370
      %v411 = vpack.c.b16 %v373, %v371
      %v412 = vpack.c.b16 %v376, %v374
      %v413 = vpack.c.b16 %v377, %v375
      %v414 = vpack.c.b16 %v380, %v378
      %v415 = vpack.c.b16 %v381, %v379
      %v416 = vpack.c.b16 %v384, %v382
      %v417 = vpack.c.b16 %v385, %v383
      %450 = vmatprep.subr.bf16.mxu0 %v401
      %451 = vmatpush1.bf16.msra.mxu0 %v400
      %452 = vmatprep.subr.bf16.mxu0 %v399
      %453 = vmatpush1.bf16.msra.mxu0 %v398
      %454 = vmatprep.subr.bf16.mxu0 %v397
      %455 = vmatpush1.bf16.msra.mxu0 %v396
      %456 = vmatprep.subr.bf16.mxu0 %v395
      %457 = vmatpush1.bf16.msra.mxu0 %v394
      %458 = vmatprep.subr.bf16.mxu0 %v393
      %459 = vmatpush1.bf16.msra.mxu0 %v392
      %460 = vmatprep.subr.bf16.mxu0 %v391
      %461 = vmatpush1.bf16.msra.mxu0 %v390
      %462 = vmatprep.subr.bf16.mxu0 %v389
      %463 = vmatpush1.bf16.msra.mxu0 %v388
      %464 = vmatprep.subr.bf16.mxu0 %v387
      %465 = vmatpush1.bf16.msra.mxu0 %v386
      %466 = vmatprep.subr.bf16.mxu0 %v417
      %467 = vmatpush2.bf16.msra.mxu0 %v416
      %468 = vmatprep.subr.bf16.mxu0 %v415
      %469 = vmatpush2.bf16.msra.mxu0 %v414
      %470 = vmatprep.subr.bf16.mxu0 %v413
      %471 = vmatpush2.bf16.msra.mxu0 %v412
      %472 = vmatprep.subr.bf16.mxu0 %v411
      %473 = vmatpush2.bf16.msra.mxu0 %v410
      %474 = vmatprep.subr.bf16.mxu0 %v409
      %475 = vmatpush2.bf16.msra.mxu0 %v408
      %476 = vmatprep.subr.bf16.mxu0 %v407
      %477 = vmatpush2.bf16.msra.mxu0 %v406
      %478 = vmatprep.subr.bf16.mxu0 %v405
      %479 = vmatpush2.bf16.msra.mxu0 %v404
      %480 = vmatprep.subr.bf16.mxu0 %v403
      %481 = vmatpush2.bf16.msra.mxu0 %v402
      %482 = vmatprep.mubr.bf16.mxu0 %v279
      %483 = vmatmul.mubr.bf16.gmra.mxu0 %v278
      %v484 = vpop.f32.mrf.mxu0
      %v485 = vadd.f32 0.0, %v484
      %v486 = vpop.f32.mrf.mxu0
      %v487 = vadd.f32 0.0, %v486
      %v488 = vpop.f32.mrf.mxu0
      %v489 = vadd.f32 0.0, %v488
      %v490 = vpop.f32.mrf.mxu0
      %v491 = vadd.f32 0.0, %v490
      %492 = vmatprep.mubr.bf16.mxu0 %v281
      %493 = vmatmul.mubr.bf16.gmra.mxu0 %v280
      %v494 = vpop.f32.mrf.mxu0
      %v495 = vadd.f32 0.0, %v494
      %v496 = vpop.f32.mrf.mxu0
      %v497 = vadd.f32 0.0, %v496
      %v498 = vpop.f32.mrf.mxu0
      %v499 = vadd.f32 0.0, %v498
      %v500 = vpop.f32.mrf.mxu0
      %v501 = vadd.f32 0.0, %v500
      %502 = vmatprep.mubr.bf16.mxu0 %v283
      %503 = vmatmul.mubr.bf16.gmra.mxu0 %v282
      %v504 = vpop.f32.mrf.mxu0
      %v505 = vadd.f32 0.0, %v504
      %v506 = vpop.f32.mrf.mxu0
      %v507 = vadd.f32 0.0, %v506
      %v508 = vpop.f32.mrf.mxu0
      %v509 = vadd.f32 0.0, %v508
      %v510 = vpop.f32.mrf.mxu0
      %v511 = vadd.f32 0.0, %v510
      %512 = vdwg.mxu0
      %513 = vst [vmem:[%s220] sm:$0xff] %v485
      %514 = vst [vmem:[%s220 + $0x8] sm:$0xff] %v487
      %515 = vst [vmem:[%s220 + $0x10] sm:$0xff] %v489
      %516 = vst [vmem:[%s220 + $0x18] sm:$0xff] %v491
      %517 = vst [vmem:[%s220 + $0x20] sm:$0xff] %v495
      %518 = vst [vmem:[%s220 + $0x28] sm:$0xff] %v497
      %519 = vst [vmem:[%s220 + $0x30] sm:$0xff] %v499
      %520 = vst [vmem:[%s220 + $0x38] sm:$0xff] %v501
      %521 = vst [vmem:[%s220 + $0x40] sm:$0xff] %v505
      %522 = vst [vmem:[%s220 + $0x48] sm:$0xff] %v507
      %523 = vst [vmem:[%s220 + $0x50] sm:$0xff] %v509
      %524 = vst [vmem:[%s220 + $0x58] sm:$0xff] %v511
      %s525 = smul.u32 6, %s25
      %p526 = scmp.lt.s32.totalorder %s24, 1
      %s527 = scalar_select %p526, %s24, 1
      %p528 = scmp.lt.s32.totalorder %s525, 5
      %s529 = scalar_select %p528, %s525, 5
      %s530 = smul.addr %s529, 2
      %s531 = smul.addr %s527, 12
      %s532 = sadd.s32 %s530, %s531
      %s533 = smul.addr %s532, 8
      %s534 = scalar_lea.vmem %s3, %s533
      // Predicated region
      $region29: #{_forward_impl.1} parent=27 // pred_check
        %p535 = pneg %p108
      $region30: #{_forward_impl.1} parent=27 // pred_check_branch
        %537 = sbr.rel (%p535) target = $region32
      $region31: #{_forward_impl.1} parent=27 // pred_region
        %s538 = smul.u32 6, %s25
      $region32: #{_forward_impl.1} parent=27 // pred_fallthru
        _
    $region28: #{_forward_impl.1} parent=5 // pred_fallthru
      _
    %p539 = scmp.le.s32.totalorder 2, %s15
    // Predicated region
    $region33: #{_forward_impl.1} parent=5 // pred_check
      %p540 = pneg %p539
    $region34: #{_forward_impl.1} parent=5 // pred_check_branch
      %542 = sbr.rel (%p540) target = $region36
    $region35: #{_forward_impl.1} parent=5 // pred_region
      %s543 = ssub.s32 %s15, 2
      // Predicated region
      $region37: #{_forward_impl.1} parent=35 // pred_check
        %p544 = pneg %p114
      $region38: #{_forward_impl.1} parent=35 // pred_check_branch
        %546 = sbr.rel (%p544) target = $region40
      $region39: #{_forward_impl.1} parent=35 // pred_region
        %s547 = smul.u32 6, %s27
        %p548 = scmp.lt.s32.totalorder %s26, 1
        %s549 = scalar_select %p548, %s26, 1
        %p550 = scmp.lt.s32.totalorder %s547, 5
        %s551 = scalar_select %p550, %s547, 5
        %s552 = smul.addr %s551, 2
        %s553 = smul.addr %s549, 12
        %s554 = sadd.s32 %s552, %s553
        %s555 = smul.addr %s554, 8
        %s556 = scalar_lea.vmem %s3, %s555
      $region40: #{_forward_impl.1} parent=35 // pred_fallthru
        _
    $region36: #{_forward_impl.1} parent=5 // pred_fallthru
      _
  $region6: #{_forward_impl.1} parent=0 // loop_footer
    %s19 = sadd.s32 1, %s15
  $region7: #{_forward_impl.1} parent=0 // loop_footer_branch
    %14 = sbr.rel target = $region3
  $region8: #{_forward_impl.1} parent=0 // loop_exit
    _

</llo_original>
